<compile_context>
chip_gen: v7x
topology: tpu7x:2x2x1
jax: 0.10.0
libtpu: 0.0.40
codegen_flags: <defaults>
</compile_context>

<pallas_src>
import functools

import jax
import jax.numpy as jnp
from jax.experimental import pallas as pl
from jax.experimental.pallas import tpu as pltpu

HIDDEN = 512   # fixed by the module definition
LANE = 128     # TPU lane width
SUBLANE_BF16 = 16


def _round_up(x, m):
    return ((x + m - 1) // m) * m


def _gte_kernel(h_ref, w1_ref, b1_ref, w2_ref, b2_ref, o_ref):
    # First linear on the MXU: (bt, F)bf16 @ (F, 512)bf16 -> f32 accumulate.
    hidden = jnp.dot(h_ref[...], w1_ref[...],
                     preferred_element_type=jnp.float32)
    # Bias + ReLU in f32 on the VPU.
    hidden = jnp.maximum(hidden + b1_ref[...], 0.0)
    # Second linear: re-cast activations to bf16 for the MXU, f32 accumulate.
    out = jnp.dot(hidden.astype(jnp.bfloat16), w2_ref[...],
                  preferred_element_type=jnp.float32) + b2_ref[...]
    o_ref[...] = out.astype(o_ref.dtype)


@functools.partial(jax.jit, static_argnames=("batch_tile",))
def ground_truth_estimator(h, w1, b1, w2, b2, *, batch_tile=256):
    """h: (B, in_features), w1: (in_features, 512), b1: (1, 512),
    w2: (512, out_features), b2: (1, out_features).  Returns (B, out_features)."""
    B, F = h.shape
    O = w2.shape[1]
    out_dtype = h.dtype

    # Lane-dense padding of the contraction dim (F) and the output dim (O).
    F_pad = _round_up(F, LANE)
    O_pad = _round_up(O, LANE)

    # Batch tile: large (amortizes grid-step overhead, fills MXU rows), but a
    # multiple of 16 (bf16 sublane packing) and no larger than the padded batch.
    bt = min(batch_tile, _round_up(B, SUBLANE_BF16))
    bt = _round_up(bt, SUBLANE_BF16)
    B_pad = _round_up(B, bt)

    # Pad + cast operands outside the kernel (one-time, cheap XLA ops;
    # zero-padding the contraction dim does not change the result).
    h_p = jnp.pad(h, ((0, B_pad - B), (0, F_pad - F))).astype(jnp.bfloat16)
    w1_p = jnp.pad(w1, ((0, F_pad - F), (0, 0))).astype(jnp.bfloat16)
    b1_c = b1.astype(jnp.float32)
    w2_p = jnp.pad(w2, ((0, 0), (0, O_pad - O))).astype(jnp.bfloat16)
    b2_p = jnp.pad(b2, ((0, 0), (0, O_pad - O))).astype(jnp.float32)

    grid = (B_pad // bt,)
    out_p = pl.pallas_call(
        _gte_kernel,
        out_shape=jax.ShapeDtypeStruct((B_pad, O_pad), out_dtype),
        grid_spec=pltpu.PrefetchScalarGridSpec(
            num_scalar_prefetch=0,
            grid=grid,
            in_specs=[
                pl.BlockSpec((bt, F_pad), lambda i: (i, 0)),        # h tile
                pl.BlockSpec((F_pad, HIDDEN), lambda i: (0, 0)),    # W1 (resident)
                pl.BlockSpec((1, HIDDEN), lambda i: (0, 0)),        # b1 (resident)
                pl.BlockSpec((HIDDEN, O_pad), lambda i: (0, 0)),    # W2 (resident)
                pl.BlockSpec((1, O_pad), lambda i: (0, 0)),         # b2 (resident)
            ],
            out_specs=pl.BlockSpec((bt, O_pad), lambda i: (i, 0)),
        ),
        compiler_params=pltpu.CompilerParams(
            dimension_semantics=("parallel",),   # shards batch across TCs on v7x
            vmem_limit_bytes=64 * 1024 * 1024,
        ),
    )(h_p, w1_p, b1_c, w2_p, b2_p)

    # Slice off batch padding and lane padding.
    return out_p[:B, :O]


def _orthogonal(key, rows, cols, gain):
    """Deterministic orthogonal init matching nn.init.orthogonal_ semantics."""
    n, m = max(rows, cols), min(rows, cols)
    a = jax.random.normal(key, (n, m), dtype=jnp.float32)
    q, r = jnp.linalg.qr(a)
    q = q * jnp.sign(jnp.diagonal(r))  # make the decomposition unique
    if rows < cols:
        q = q.T
    return gain * q[:rows, :cols]


if __name__ == "__main__":
    # Small, module-consistent shapes: batch=8, in_features=32, out_features=16.
    B, IN_F, OUT_F = 8, 32, 16
    gain = float(jnp.sqrt(2.0))

    key = jax.random.PRNGKey(0)
    k_h, k_w1, k_w2, k_b1, k_b2 = jax.random.split(key, 5)

    h = jax.random.normal(k_h, (B, IN_F), dtype=jnp.float32)

    # PyTorch stores Linear weights as (out, in); build that way, transpose to
    # the kernel's (in, out) layout.
    w1_pt = _orthogonal(k_w1, HIDDEN, IN_F, gain)      # (512, in_features)
    w2_pt = _orthogonal(k_w2, OUT_F, HIDDEN, gain)     # (out_features, 512)
    b1 = (0.01 * jax.random.normal(k_b1, (1, HIDDEN))).astype(jnp.float32)
    b2 = (0.01 * jax.random.normal(k_b2, (1, OUT_F))).astype(jnp.float32)

    w1 = w1_pt.T  # (in_features, 512)
    w2 = w2_pt.T  # (512, out_features)

    out = ground_truth_estimator(h, w1, b1, w2, b2)
    out = jax.block_until_ready(out)
    assert out.shape == (B, OUT_F)

    # Reference with the same bf16 operand quantization (f32 accumulation).
    def _q(x):
        return x.astype(jnp.bfloat16).astype(jnp.float32)

    hid = jnp.maximum(_q(h) @ _q(w1) + b1, 0.0)
    ref = _q(hid) @ _q(w2) + b2
    assert jnp.allclose(out, ref, atol=2e-2, rtol=2e-2), "mismatch vs bf16 reference"

    # Loose sanity check against full-f32 math (bf16 quantization tolerance).
    ref_f32 = jnp.maximum(h @ w1 + b1, 0.0) @ w2 + b2
    assert jnp.allclose(out, ref_f32, atol=1e-1, rtol=1e-1), "mismatch vs f32 reference"

    print("KERNEL_OK")
</pallas_src>

<mosaic_0001>
module attributes {stable_mosaic.version = 11 : i64} {
  func.func @_gte_kernel(%arg0: i32, %arg1: memref<16x128xbf16, #tpu.memory_space<vmem>>, %arg2: memref<128x512xbf16, #tpu.memory_space<vmem>>, %arg3: memref<1x512xf32, #tpu.memory_space<vmem>>, %arg4: memref<512x128xbf16, #tpu.memory_space<vmem>>, %arg5: memref<1x128xf32, #tpu.memory_space<vmem>>, %arg6: memref<16x128xf32, #tpu.memory_space<vmem>>) attributes {dimension_semantics = [#tpu.dimension_semantics<parallel>], iteration_bounds = array<i64: 1>, scalar_prefetch = 0 : i64, scratch_operands = 0 : i64, tpu.core_type = #tpu.core_type<tc>, window_params = [{transform_indices = @transform_0, window_bounds = array<i64: 16, 128>}, {pipeline_mode = #tpu.pipeline_mode<synchronous>, transform_indices = @transform_1, window_bounds = array<i64: 128, 512>}, {pipeline_mode = #tpu.pipeline_mode<synchronous>, transform_indices = @transform_2, window_bounds = array<i64: 1, 512>}, {pipeline_mode = #tpu.pipeline_mode<synchronous>, transform_indices = @transform_3, window_bounds = array<i64: 512, 128>}, {pipeline_mode = #tpu.pipeline_mode<synchronous>, transform_indices = @transform_4, window_bounds = array<i64: 1, 128>}, {transform_indices = @transform_5, window_bounds = array<i64: 16, 128>}]} {
    %c0 = arith.constant 0 : index
    %c0_0 = arith.constant 0 : index
    %0 = vector.load %arg1[%c0, %c0_0] : memref<16x128xbf16, #tpu.memory_space<vmem>>, vector<16x128xbf16>
    %c0_1 = arith.constant 0 : index
    %c0_2 = arith.constant 0 : index
    %1 = vector.load %arg2[%c0_1, %c0_2] : memref<128x512xbf16, #tpu.memory_space<vmem>>, vector<128x512xbf16>
    %cst = arith.constant dense<0.000000e+00> : vector<16x512xf32>
    %2 = tpu.matmul %0, %1, %cst {dimension_numbers = #tpu.dot_dimension_numbers<[1], [0], [0], [1], [0, 0, 1, 1], [], []>} : vector<16x128xbf16>, vector<128x512xbf16>, vector<16x512xf32> -> vector<16x512xf32>
    %c0_3 = arith.constant 0 : index
    %c0_4 = arith.constant 0 : index
    %3 = vector.load %arg3[%c0_3, %c0_4] : memref<1x512xf32, #tpu.memory_space<vmem>>, vector<1x512xf32>
    %4 = vector.broadcast %3 : vector<1x512xf32> to vector<16x512xf32>
    %5 = arith.addf %2, %4 : vector<16x512xf32>
    %cst_5 = arith.constant 0.000000e+00 : f32
    %6 = vector.broadcast %cst_5 : f32 to vector<16x512xf32>
    %7 = arith.maximumf %5, %6 : vector<16x512xf32>
    %8 = arith.truncf %7 : vector<16x512xf32> to vector<16x512xbf16>
    %c0_6 = arith.constant 0 : index
    %c0_7 = arith.constant 0 : index
    %9 = vector.load %arg4[%c0_6, %c0_7] : memref<512x128xbf16, #tpu.memory_space<vmem>>, vector<512x128xbf16>
    %cst_8 = arith.constant dense<0.000000e+00> : vector<16x128xf32>
    %10 = tpu.matmul %8, %9, %cst_8 {dimension_numbers = #tpu.dot_dimension_numbers<[1], [0], [0], [1], [0, 0, 1, 1], [], []>} : vector<16x512xbf16>, vector<512x128xbf16>, vector<16x128xf32> -> vector<16x128xf32>
    %c0_9 = arith.constant 0 : index
    %c0_10 = arith.constant 0 : index
    %11 = vector.load %arg5[%c0_9, %c0_10] : memref<1x128xf32, #tpu.memory_space<vmem>>, vector<1x128xf32>
    %12 = vector.broadcast %11 : vector<1x128xf32> to vector<16x128xf32>
    %13 = arith.addf %10, %12 : vector<16x128xf32>
    %c0_11 = arith.constant 0 : index
    %c0_12 = arith.constant 0 : index
    %14 = vector.load %arg6[%c0_11, %c0_12] : memref<16x128xf32, #tpu.memory_space<vmem>>, vector<16x128xf32>
    tpu.vector_store %arg6[%c0_11, %c0_12], %13 {strides = array<i32>} : memref<16x128xf32, #tpu.memory_space<vmem>>, vector<16x128xf32>,
    return
  }
  func.func @transform_0(%arg0: i32) -> (i32, i32) {
    %c0_i32 = arith.constant 0 : i32
    %c0_i32_0 = arith.constant 0 : i32
    return %arg0, %c0_i32 : i32, i32
  }
  func.func @transform_1(%arg0: i32) -> (i32, i32) {
    %c0_i32 = arith.constant 0 : i32
    %c0_i32_0 = arith.constant 0 : i32
    %c0_i32_1 = arith.constant 0 : i32
    return %c0_i32, %c0_i32_0 : i32, i32
  }
  func.func @transform_2(%arg0: i32) -> (i32, i32) {
    %c0_i32 = arith.constant 0 : i32
    %c0_i32_0 = arith.constant 0 : i32
    %c0_i32_1 = arith.constant 0 : i32
    return %c0_i32, %c0_i32_0 : i32, i32
  }
  func.func @transform_3(%arg0: i32) -> (i32, i32) {
    %c0_i32 = arith.constant 0 : i32
    %c0_i32_0 = arith.constant 0 : i32
    %c0_i32_1 = arith.constant 0 : i32
    return %c0_i32, %c0_i32_0 : i32, i32
  }
  func.func @transform_4(%arg0: i32) -> (i32, i32) {
    %c0_i32 = arith.constant 0 : i32
    %c0_i32_0 = arith.constant 0 : i32
    %c0_i32_1 = arith.constant 0 : i32
    return %c0_i32, %c0_i32_0 : i32, i32
  }
  func.func @transform_5(%arg0: i32) -> (i32, i32) {
    %c0_i32 = arith.constant 0 : i32
    %c0_i32_0 = arith.constant 0 : i32
    return %arg0, %c0_i32 : i32, i32
  }
}

</mosaic_0001>

<llo_original>
// kernel: ground_truth_estimator.1
$region0: #{ground_truth_estimator.1}
  #allocation0 [shape = 'u32[]', space=smem, size = 0x4, offset = 0x4, fixed_abs, tag = 'smem constant byte address 0x4 - core index']
  #allocation1 [shape = 'u32[144,128]{1,0:T(1,128)}', space=vmem, size = 0x12000, scoped, tag = 'internal scratch']
  %s0 = inlined_call_operand.hbm [shape: bf16[16,128], index: 0, kind: input, shape index: {}]
  %s1 = inlined_call_operand.hbm [shape: bf16[128,512], index: 1, kind: input, shape index: {}]
  %s2 = inlined_call_operand.hbm [shape: f32[1,512], index: 2, kind: input, shape index: {}]
  %s3 = inlined_call_operand.hbm [shape: bf16[512,128], index: 3, kind: input, shape index: {}]
  %s4 = inlined_call_operand.hbm [shape: f32[1,128], index: 4, kind: input, shape index: {}]
  %s5 = inlined_call_operand.hbm [shape: f32[16,128], index: 5, kind: output, shape index: {}]
  %s6 = sld [smem:[#allocation0]]
  $region50: #{ground_truth_estimator.1} parent=0
    _
  %s8 = ssub.s32 1, %s6
  %s9 = scalar_select 0, %s8, %s6
  $region1: #{ground_truth_estimator.1} parent=0
    #allocation2 [shape = 'u8[4096]{0}', space=vmem, size = 0x1000, scoped, tag = 'input window, operand 0, single buffered']
    #allocation3 [shape = 's32[1]{0}', space=sflag, size = 0x4, scoped, tag = 'scoped memory for ground_truth_estimator.1']
    #allocation4 [shape = 's32[1]{0}', space=sflag, size = 0x4, scoped, tag = 'scoped memory for ground_truth_estimator.1']
    #allocation5 [shape = 'u8[131072]{0}', space=vmem, size = 0x20000, scoped, tag = 'input window, operand 1, single buffered']
    #allocation6 [shape = 's32[1]{0}', space=sflag, size = 0x4, scoped, tag = 'scoped memory for ground_truth_estimator.1']
    #allocation7 [shape = 'u8[2048]{0}', space=vmem, size = 0x800, scoped, tag = 'input window, operand 2, single buffered']
    #allocation8 [shape = 'u8[131072]{0}', space=vmem, size = 0x20000, scoped, tag = 'input window, operand 3, single buffered']
    #allocation9 [shape = 's32[1]{0}', space=sflag, size = 0x4, scoped, tag = 'scoped memory for ground_truth_estimator.1']
    #allocation10 [shape = 'u8[512]{0}', space=vmem, size = 0x400, scoped, tag = 'input window, operand 4, single buffered']
    #allocation11 [shape = 'u8[8192]{0}', space=vmem, size = 0x2000, scoped, tag = 'output window, operand 0, single buffered']
    %10 = vsyncpa [#allocation3], 0
    %11 = vsyncpa [#allocation6], 0
    %12 = vsyncpa [#allocation9], 0
    %13 = vsyncpa [#allocation4], 0
    // Predicated region
    $region2: #{ground_truth_estimator.1} parent=1 // pred_check
      _
    $region3: #{ground_truth_estimator.1} parent=1 // pred_check_branch
      %15 = sbr.rel (0) target = $region5
    $region4: #{ground_truth_estimator.1} parent=1 // pred_region
      %s17 = ssub.s32 128, 128
      %18 = vsyncadd [#allocation3], %s17
      %s19 = sshll.u32 [#allocation2], 4
      %s20 = int_to_ptr.vmem [resolvable:$true] %s19
      %25 = dma.hbm_to_vmem [thread:$0]  %s0, 128, %s20, [#allocation3], 64, 64, 4
    $region5: #{ground_truth_estimator.1} parent=1 // pred_fallthru
      _
    // Predicated region
    $region6: #{ground_truth_estimator.1} parent=1 // pred_check
      _
    $region7: #{ground_truth_estimator.1} parent=1 // pred_check_branch
      %27 = sbr.rel (0) target = $region9
    $region8: #{ground_truth_estimator.1} parent=1 // pred_region
      %s29 = ssub.s32 4096, 4096
      %30 = vsyncadd [#allocation6], %s29
      %s31 = sshll.u32 [#allocation5], 4
      %s32 = int_to_ptr.vmem [resolvable:$true] %s31
      %37 = dma.hbm_to_vmem [thread:$0]  %s1, 4096, %s32, [#allocation6], 256, 256, 16
    $region9: #{ground_truth_estimator.1} parent=1 // pred_fallthru
      _
    // Predicated region
    $region10: #{ground_truth_estimator.1} parent=1 // pred_check
      _
    $region11: #{ground_truth_estimator.1} parent=1 // pred_check_branch
      %39 = sbr.rel (0) target = $region13
    $region12: #{ground_truth_estimator.1} parent=1 // pred_region
      %s41 = ssub.s32 64, 64
      %42 = vsyncadd [#allocation6], %s41
      %s44 = sshll.u32 [#allocation7], 4
      %s45 = int_to_ptr.vmem [resolvable:$true] %s44
      %47 = dma.hbm_to_vmem [thread:$0]  %s2, 64, %s45, [#allocation6]
    $region13: #{ground_truth_estimator.1} parent=1 // pred_fallthru
      _
    // Predicated region
    $region14: #{ground_truth_estimator.1} parent=1 // pred_check
      _
    $region15: #{ground_truth_estimator.1} parent=1 // pred_check_branch
      %49 = sbr.rel (0) target = $region17
    $region16: #{ground_truth_estimator.1} parent=1 // pred_region
      %s51 = ssub.s32 4096, 4096
      %52 = vsyncadd [#allocation9], %s51
      %s53 = sshll.u32 [#allocation8], 4
      %s54 = int_to_ptr.vmem [resolvable:$true] %s53
      %59 = dma.hbm_to_vmem [thread:$0]  %s3, 4096, %s54, [#allocation9], 64, 64, 4
    $region17: #{ground_truth_estimator.1} parent=1 // pred_fallthru
      _
    // Predicated region
    $region18: #{ground_truth_estimator.1} parent=1 // pred_check
      _
    $region19: #{ground_truth_estimator.1} parent=1 // pred_check_branch
      %61 = sbr.rel (0) target = $region21
    $region20: #{ground_truth_estimator.1} parent=1 // pred_region
      %s63 = ssub.s32 16, 16
      %64 = vsyncadd [#allocation9], %s63
      %s66 = sshll.u32 [#allocation10], 4
      %s67 = int_to_ptr.vmem [resolvable:$true] %s66
      %69 = dma.hbm_to_vmem [thread:$0]  %s4, 16, %s67, [#allocation9]
    $region21: #{ground_truth_estimator.1} parent=1 // pred_fallthru
      _
    // Predicated region
    $region22: #{ground_truth_estimator.1} parent=1 // pred_check
      _
    $region23: #{ground_truth_estimator.1} parent=1 // pred_check_branch
      %71 = sbr.rel (0) target = $region25
    $region24: #{ground_truth_estimator.1} parent=1 // pred_region
      %72 = dma.done [#allocation3], 128
    $region25: #{ground_truth_estimator.1} parent=1 // pred_fallthru
      _
    // Predicated region
    $region26: #{ground_truth_estimator.1} parent=1 // pred_check
      _
    $region27: #{ground_truth_estimator.1} parent=1 // pred_check_branch
      %74 = sbr.rel (0) target = $region29
    $region28: #{ground_truth_estimator.1} parent=1 // pred_region
      %75 = dma.done [#allocation6], 4096
    $region29: #{ground_truth_estimator.1} parent=1 // pred_fallthru
      _
    // Predicated region
    $region30: #{ground_truth_estimator.1} parent=1 // pred_check
      _
    $region31: #{ground_truth_estimator.1} parent=1 // pred_check_branch
      %77 = sbr.rel (0) target = $region33
    $region32: #{ground_truth_estimator.1} parent=1 // pred_region
      %78 = dma.done [#allocation6], 64
    $region33: #{ground_truth_estimator.1} parent=1 // pred_fallthru
      _
    // Predicated region
    $region34: #{ground_truth_estimator.1} parent=1 // pred_check
      _
    $region35: #{ground_truth_estimator.1} parent=1 // pred_check_branch
      %80 = sbr.rel (0) target = $region37
    $region36: #{ground_truth_estimator.1} parent=1 // pred_region
      %81 = dma.done [#allocation9], 4096
    $region37: #{ground_truth_estimator.1} parent=1 // pred_fallthru
      _
    // Predicated region
    $region38: #{ground_truth_estimator.1} parent=1 // pred_check
      _
    $region39: #{ground_truth_estimator.1} parent=1 // pred_check_branch
      %83 = sbr.rel (0) target = $region41
    $region40: #{ground_truth_estimator.1} parent=1 // pred_region
      %84 = dma.done [#allocation9], 16
    $region41: #{ground_truth_estimator.1} parent=1 // pred_fallthru
      _
    %v86 = vld [vmem:[#allocation2] sm:$0xf]
    %v87 = vld [vmem:[#allocation2 + $0x4] sm:$0xf]
    %v88 = vld [vmem:[#allocation5] sm:$0xff]
    %v89 = vld [vmem:[#allocation5 + $0x8] sm:$0xff]
    %v90 = vld [vmem:[#allocation5 + $0x10] sm:$0xff]
    %v91 = vld [vmem:[#allocation5 + $0x18] sm:$0xff]
    %v92 = vld [vmem:[#allocation5 + $0x20] sm:$0xff]
    %v93 = vld [vmem:[#allocation5 + $0x28] sm:$0xff]
    %v94 = vld [vmem:[#allocation5 + $0x30] sm:$0xff]
    %v95 = vld [vmem:[#allocation5 + $0x38] sm:$0xff]
    %v96 = vld [vmem:[#allocation5 + $0x40] sm:$0xff]
    %v97 = vld [vmem:[#allocation5 + $0x48] sm:$0xff]
    %v98 = vld [vmem:[#allocation5 + $0x50] sm:$0xff]
    %v99 = vld [vmem:[#allocation5 + $0x58] sm:$0xff]
    %v100 = vld [vmem:[#allocation5 + $0x60] sm:$0xff]
    %v101 = vld [vmem:[#allocation5 + $0x68] sm:$0xff]
    %v102 = vld [vmem:[#allocation5 + $0x70] sm:$0xff]
    %v103 = vld [vmem:[#allocation5 + $0x78] sm:$0xff]
    %v104 = vld [vmem:[#allocation5 + $0x80] sm:$0xff]
    %v105 = vld [vmem:[#allocation5 + $0x88] sm:$0xff]
    %v106 = vld [vmem:[#allocation5 + $0x90] sm:$0xff]
    %v107 = vld [vmem:[#allocation5 + $0x98] sm:$0xff]
    %v108 = vld [vmem:[#allocation5 + $0xa0] sm:$0xff]
    %v109 = vld [vmem:[#allocation5 + $0xa8] sm:$0xff]
    %v110 = vld [vmem:[#allocation5 + $0xb0] sm:$0xff]
    %v111 = vld [vmem:[#allocation5 + $0xb8] sm:$0xff]
    %v112 = vld [vmem:[#allocation5 + $0xc0] sm:$0xff]
    %v113 = vld [vmem:[#allocation5 + $0xc8] sm:$0xff]
    %v114 = vld [vmem:[#allocation5 + $0xd0] sm:$0xff]
    %v115 = vld [vmem:[#allocation5 + $0xd8] sm:$0xff]
    %v116 = vld [vmem:[#allocation5 + $0xe0] sm:$0xff]
    %v117 = vld [vmem:[#allocation5 + $0xe8] sm:$0xff]
    %v118 = vld [vmem:[#allocation5 + $0xf0] sm:$0xff]
    %v119 = vld [vmem:[#allocation5 + $0xf8] sm:$0xff]
    %v120 = vld [vmem:[#allocation7] sm:$0xf]
    %v122 = vlaneseq
    %v123 = vshrl.u32 %v122, 7
    %v124 = vsub.s32 0, %v123
    %v125 = vrot.slane %v120, %v124
    %v126 = vlaneseq
    %v127 = vshrl.u32 %v126, 7
    %v128 = vsub.s32 1, %v127
    %v129 = vrot.slane %v120, %v128
    %v130 = vlaneseq
    %v131 = vshrl.u32 %v130, 7
    %v132 = vsub.s32 2, %v131
    %v133 = vrot.slane %v120, %v132
    %v134 = vlaneseq
    %v135 = vshrl.u32 %v134, 7
    %v136 = vsub.s32 3, %v135
    %v137 = vrot.slane %v120, %v136
    %v144 = vunpack.c.l.b16 %v86
    %v145 = vunpack.c.l.b16 %v87
    %v146 = vpack.c.b16 %v145, %v144
    %v180 = vunpack.c.l.b16 %v88
    %v181 = vunpack.c.h.b16 %v88
    %v182 = vunpack.c.l.b16 %v89
    %v183 = vunpack.c.h.b16 %v89
    %v184 = vunpack.c.l.b16 %v90
    %v185 = vunpack.c.h.b16 %v90
    %v186 = vunpack.c.l.b16 %v91
    %v187 = vunpack.c.h.b16 %v91
    %v188 = vunpack.c.l.b16 %v92
    %v189 = vunpack.c.h.b16 %v92
    %v190 = vunpack.c.l.b16 %v93
    %v191 = vunpack.c.h.b16 %v93
    %v192 = vunpack.c.l.b16 %v94
    %v193 = vunpack.c.h.b16 %v94
    %v194 = vunpack.c.l.b16 %v95
    %v195 = vunpack.c.h.b16 %v95
    %v196 = vunpack.c.l.b16 %v96
    %v197 = vunpack.c.h.b16 %v96
    %v198 = vunpack.c.l.b16 %v97
    %v199 = vunpack.c.h.b16 %v97
    %v200 = vunpack.c.l.b16 %v98
    %v201 = vunpack.c.h.b16 %v98
    %v202 = vunpack.c.l.b16 %v99
    %v203 = vunpack.c.h.b16 %v99
    %v204 = vunpack.c.l.b16 %v100
    %v205 = vunpack.c.h.b16 %v100
    %v206 = vunpack.c.l.b16 %v101
    %v207 = vunpack.c.h.b16 %v101
    %v208 = vunpack.c.l.b16 %v102
    %v209 = vunpack.c.h.b16 %v102
    %v210 = vunpack.c.l.b16 %v103
    %v211 = vunpack.c.h.b16 %v103
    %v212 = vunpack.c.l.b16 %v104
    %v213 = vunpack.c.h.b16 %v104
    %v214 = vunpack.c.l.b16 %v105
    %v215 = vunpack.c.h.b16 %v105
    %v216 = vunpack.c.l.b16 %v106
    %v217 = vunpack.c.h.b16 %v106
    %v218 = vunpack.c.l.b16 %v107
    %v219 = vunpack.c.h.b16 %v107
    %v220 = vunpack.c.l.b16 %v108
    %v221 = vunpack.c.h.b16 %v108
    %v222 = vunpack.c.l.b16 %v109
    %v223 = vunpack.c.h.b16 %v109
    %v224 = vunpack.c.l.b16 %v110
    %v225 = vunpack.c.h.b16 %v110
    %v226 = vunpack.c.l.b16 %v111
    %v227 = vunpack.c.h.b16 %v111
    %v228 = vunpack.c.l.b16 %v112
    %v229 = vunpack.c.h.b16 %v112
    %v230 = vunpack.c.l.b16 %v113
    %v231 = vunpack.c.h.b16 %v113
    %v232 = vunpack.c.l.b16 %v114
    %v233 = vunpack.c.h.b16 %v114
    %v234 = vunpack.c.l.b16 %v115
    %v235 = vunpack.c.h.b16 %v115
    %v236 = vunpack.c.l.b16 %v116
    %v237 = vunpack.c.h.b16 %v116
    %v238 = vunpack.c.l.b16 %v117
    %v239 = vunpack.c.h.b16 %v117
    %v240 = vunpack.c.l.b16 %v118
    %v241 = vunpack.c.h.b16 %v118
    %v242 = vunpack.c.l.b16 %v119
    %v243 = vunpack.c.h.b16 %v119
    %v244 = vpack.c.b16 %v184, %v180
    %v245 = vpack.c.b16 %v185, %v181
    %v246 = vpack.c.b16 %v186, %v182
    %v247 = vpack.c.b16 %v187, %v183
    %v248 = vpack.c.b16 %v192, %v188
    %v249 = vpack.c.b16 %v193, %v189
    %v250 = vpack.c.b16 %v194, %v190
    %v251 = vpack.c.b16 %v195, %v191
    %v252 = vpack.c.b16 %v200, %v196
    %v253 = vpack.c.b16 %v201, %v197
    %v254 = vpack.c.b16 %v202, %v198
    %v255 = vpack.c.b16 %v203, %v199
    %v256 = vpack.c.b16 %v208, %v204
    %v257 = vpack.c.b16 %v209, %v205
    %v258 = vpack.c.b16 %v210, %v206
    %v259 = vpack.c.b16 %v211, %v207
    %v260 = vpack.c.b16 %v216, %v212
    %v261 = vpack.c.b16 %v217, %v213
    %v262 = vpack.c.b16 %v218, %v214
    %v263 = vpack.c.b16 %v219, %v215
    %v264 = vpack.c.b16 %v224, %v220
    %v265 = vpack.c.b16 %v225, %v221
    %v266 = vpack.c.b16 %v226, %v222
    %v267 = vpack.c.b16 %v227, %v223
    %v268 = vpack.c.b16 %v232, %v228
    %v269 = vpack.c.b16 %v233, %v229
    %v270 = vpack.c.b16 %v234, %v230
    %v271 = vpack.c.b16 %v235, %v231
    %v272 = vpack.c.b16 %v240, %v236
    %v273 = vpack.c.b16 %v241, %v237
    %v274 = vpack.c.b16 %v242, %v238
    %v275 = vpack.c.b16 %v243, %v239
    %308 = vmatprep.subr.bf16.mxu0 %v245
    %309 = vmatpush1.bf16.msra.mxu0 %v244
    %310 = vmatprep.subr.bf16.mxu0 %v249
    %311 = vmatpush1.bf16.msra.mxu0 %v248
    %312 = vmatprep.subr.bf16.mxu0 %v253
    %313 = vmatpush1.bf16.msra.mxu0 %v252
    %314 = vmatprep.subr.bf16.mxu0 %v257
    %315 = vmatpush1.bf16.msra.mxu0 %v256
    %316 = vmatprep.subr.bf16.mxu0 %v261
    %317 = vmatpush1.bf16.msra.mxu0 %v260
    %318 = vmatprep.subr.bf16.mxu0 %v265
    %319 = vmatpush1.bf16.msra.mxu0 %v264
    %320 = vmatprep.subr.bf16.mxu0 %v269
    %321 = vmatpush1.bf16.msra.mxu0 %v268
    %322 = vmatprep.subr.bf16.mxu0 %v273
    %323 = vmatpush1.bf16.msra.mxu0 %v272
    %324 = vmatprep.subr.bf16.mxu0 0
    %325 = vmatpush1.bf16.msra.mxu0 0
    %326 = vmatprep.subr.bf16.mxu0 0
    %327 = vmatpush1.bf16.msra.mxu0 0
    %328 = vmatprep.subr.bf16.mxu0 0
    %329 = vmatpush1.bf16.msra.mxu0 0
    %330 = vmatprep.subr.bf16.mxu0 0
    %331 = vmatpush1.bf16.msra.mxu0 0
    %332 = vmatprep.subr.bf16.mxu0 0
    %333 = vmatpush1.bf16.msra.mxu0 0
    %334 = vmatprep.subr.bf16.mxu0 0
    %335 = vmatpush1.bf16.msra.mxu0 0
    %336 = vmatprep.subr.bf16.mxu0 0
    %337 = vmatpush1.bf16.msra.mxu0 0
    %338 = vmatprep.subr.bf16.mxu0 0
    %339 = vmatpush1.bf16.msra.mxu0 0
    %340 = vmatprep.mubr.bf16.mxu0 0
    %341 = vmatmul.mubr.bf16.gmra.mrb[0].mxu0 %v146
    %v342 = vpop.f32.mrb[0].mxu0
    %v343 = vadd.f32 %v125, %v342
    %v344 = vpop.f32.mrb[0].mxu0
    %v345 = vadd.f32 %v129, %v344
    %v346 = vpop.f32.mrb[0].mxu0
    %v347 = vadd.f32 %v125, %v346
    %v348 = vpop.f32.mrb[0].mxu0
    %v349 = vadd.f32 %v129, %v348
    %350 = vdwg.mxu0
    %351 = vmatprep.subr.bf16.mxu0 %v247
    %352 = vmatpush1.bf16.msra.mxu0 %v246
    %353 = vmatprep.subr.bf16.mxu0 %v251
    %354 = vmatpush1.bf16.msra.mxu0 %v250
    %355 = vmatprep.subr.bf16.mxu0 %v255
    %356 = vmatpush1.bf16.msra.mxu0 %v254
    %357 = vmatprep.subr.bf16.mxu0 %v259
    %358 = vmatpush1.bf16.msra.mxu0 %v258
    %359 = vmatprep.subr.bf16.mxu0 %v263
    %360 = vmatpush1.bf16.msra.mxu0 %v262
    %361 = vmatprep.subr.bf16.mxu0 %v267
    %362 = vmatpush1.bf16.msra.mxu0 %v266
    %363 = vmatprep.subr.bf16.mxu0 %v271
    %364 = vmatpush1.bf16.msra.mxu0 %v270
    %365 = vmatprep.subr.bf16.mxu0 %v275
    %366 = vmatpush1.bf16.msra.mxu0 %v274
    %367 = vmatprep.subr.bf16.mxu0 0
    %368 = vmatpush1.bf16.msra.mxu0 0
    %369 = vmatprep.subr.bf16.mxu0 0
    %370 = vmatpush1.bf16.msra.mxu0 0
    %371 = vmatprep.subr.bf16.mxu0 0
    %372 = vmatpush1.bf16.msra.mxu0 0
    %373 = vmatprep.subr.bf16.mxu0 0
    %374 = vmatpush1.bf16.msra.mxu0 0
    %375 = vmatprep.subr.bf16.mxu0 0
    %376 = vmatpush1.bf16.msra.mxu0 0
    %377 = vmatprep.subr.bf16.mxu0 0
    %378 = vmatpush1.bf16.msra.mxu0 0
    %379 = vmatprep.subr.bf16.mxu0 0
    %380 = vmatpush1.bf16.msra.mxu0 0
    %381 = vmatprep.subr.bf16.mxu0 0
    %382 = vmatpush1.bf16.msra.mxu0 0
    %383 = vmatprep.mubr.bf16.mxu0 0
    %384 = vmatmul.mubr.bf16.gmra.mrb[0].mxu0 %v146
    %v385 = vpop.f32.mrb[0].mxu0
    %v386 = vadd.f32 %v133, %v385
    %v387 = vpop.f32.mrb[0].mxu0
    %v388 = vadd.f32 %v137, %v387
    %v389 = vpop.f32.mrb[0].mxu0
    %v390 = vadd.f32 %v133, %v389
    %v391 = vpop.f32.mrb[0].mxu0
    %v392 = vadd.f32 %v137, %v391
    %393 = vdwg.mxu0
    %v394 = vmax.f32 %v343, 0.0
    %v395 = vmax.f32 %v345, 0.0
    %v396 = vmax.f32 %v386, 0.0
    %v397 = vmax.f32 %v388, 0.0
    %v398 = vmax.f32 %v347, 0.0
    %v399 = vmax.f32 %v349, 0.0
    %v400 = vmax.f32 %v390, 0.0
    %v401 = vmax.f32 %v392, 0.0
    %v402 = vpack.c.bf16 %v398, %v394
    %v403 = vpack.c.bf16 %v399, %v395
    %v404 = vpack.c.bf16 %v400, %v396
    %v405 = vpack.c.bf16 %v401, %v397
    %v406 = vld [vmem:[#allocation8] sm:$0xf]
    %v407 = vld [vmem:[#allocation8 + $0x4] sm:$0xf]
    %v408 = vld [vmem:[#allocation8 + $0x8] sm:$0xf]
    %v409 = vld [vmem:[#allocation8 + $0xc] sm:$0xf]
    %v410 = vld [vmem:[#allocation8 + $0x10] sm:$0xf]
    %v411 = vld [vmem:[#allocation8 + $0x14] sm:$0xf]
    %v412 = vld [vmem:[#allocation8 + $0x18] sm:$0xf]
    %v413 = vld [vmem:[#allocation8 + $0x1c] sm:$0xf]
    %v414 = vld [vmem:[#allocation8 + $0x20] sm:$0xf]
    %v415 = vld [vmem:[#allocation8 + $0x24] sm:$0xf]
    %v416 = vld [vmem:[#allocation8 + $0x28] sm:$0xf]
    %v417 = vld [vmem:[#allocation8 + $0x2c] sm:$0xf]
    %v418 = vld [vmem:[#allocation8 + $0x30] sm:$0xf]
    %v419 = vld [vmem:[#allocation8 + $0x34] sm:$0xf]
    %v420 = vld [vmem:[#allocation8 + $0x38] sm:$0xf]
    %v421 = vld [vmem:[#allocation8 + $0x3c] sm:$0xf]
    %v422 = vld [vmem:[#allocation8 + $0x40] sm:$0xf]
    %v423 = vld [vmem:[#allocation8 + $0x44] sm:$0xf]
    %v424 = vld [vmem:[#allocation8 + $0x48] sm:$0xf]
    %v425 = vld [vmem:[#allocation8 + $0x4c] sm:$0xf]
    %v426 = vld [vmem:[#allocation8 + $0x50] sm:$0xf]
    %v427 = vld [vmem:[#allocation8 + $0x54] sm:$0xf]
    %v428 = vld [vmem:[#allocation8 + $0x58] sm:$0xf]
    %v429 = vld [vmem:[#allocation8 + $0x5c] sm:$0xf]
    %v430 = vld [vmem:[#allocation8 + $0x60] sm:$0xf]
    %v431 = vld [vmem:[#allocation8 + $0x64] sm:$0xf]
    %v432 = vld [vmem:[#allocation8 + $0x68] sm:$0xf]
    %v433 = vld [vmem:[#allocation8 + $0x6c] sm:$0xf]
    %v434 = vld [vmem:[#allocation8 + $0x70] sm:$0xf]
    %v435 = vld [vmem:[#allocation8 + $0x74] sm:$0xf]
    %v436 = vld [vmem:[#allocation8 + $0x78] sm:$0xf]
    %v437 = vld [vmem:[#allocation8 + $0x7c] sm:$0xf]
    %v438 = vld [vmem:[#allocation8 + $0x80] sm:$0xf]
    %v439 = vld [vmem:[#allocation8 + $0x84] sm:$0xf]
    %v440 = vld [vmem:[#allocation8 + $0x88] sm:$0xf]
    %v441 = vld [vmem:[#allocation8 + $0x8c] sm:$0xf]
    %v442 = vld [vmem:[#allocation8 + $0x90] sm:$0xf]
    %v443 = vld [vmem:[#allocation8 + $0x94] sm:$0xf]
    %v444 = vld [vmem:[#allocation8 + $0x98] sm:$0xf]
    %v445 = vld [vmem:[#allocation8 + $0x9c] sm:$0xf]
    %v446 = vld [vmem:[#allocation8 + $0xa0] sm:$0xf]
    %v447 = vld [vmem:[#allocation8 + $0xa4] sm:$0xf]
    %v448 = vld [vmem:[#allocation8 + $0xa8] sm:$0xf]
    %v449 = vld [vmem:[#allocation8 + $0xac] sm:$0xf]
    %v450 = vld [vmem:[#allocation8 + $0xb0] sm:$0xf]
    %v451 = vld [vmem:[#allocation8 + $0xb4] sm:$0xf]
    %v452 = vld [vmem:[#allocation8 + $0xb8] sm:$0xf]
    %v453 = vld [vmem:[#allocation8 + $0xbc] sm:$0xf]
    %v454 = vld [vmem:[#allocation8 + $0xc0] sm:$0xf]
    %v455 = vld [vmem:[#allocation8 + $0xc4] sm:$0xf]
    %v456 = vld [vmem:[#allocation8 + $0xc8] sm:$0xf]
    %v457 = vld [vmem:[#allocation8 + $0xcc] sm:$0xf]
    %v458 = vld [vmem:[#allocation8 + $0xd0] sm:$0xf]
    %v459 = vld [vmem:[#allocation8 + $0xd4] sm:$0xf]
    %v460 = vld [vmem:[#allocation8 + $0xd8] sm:$0xf]
    %v461 = vld [vmem:[#allocation8 + $0xdc] sm:$0xf]
    %v462 = vld [vmem:[#allocation8 + $0xe0] sm:$0xf]
    %v463 = vld [vmem:[#allocation8 + $0xe4] sm:$0xf]
    %v464 = vld [vmem:[#allocation8 + $0xe8] sm:$0xf]
    %v465 = vld [vmem:[#allocation8 + $0xec] sm:$0xf]
    %v466 = vld [vmem:[#allocation8 + $0xf0] sm:$0xf]
    %v467 = vld [vmem:[#allocation8 + $0xf4] sm:$0xf]
    %v468 = vld [vmem:[#allocation8 + $0xf8] sm:$0xf]
    %v469 = vld [vmem:[#allocation8 + $0xfc] sm:$0xf]
    %v470 = vld [vmem:[#allocation10] sm:$0x1]
    %v472 = vlaneseq
    %v473 = vshrl.u32 %v472, 7
    %v474 = vsub.s32 0, %v473
    %v475 = vrot.slane %v470, %v474
    %v541 = vunpack.c.l.b16 %v406
    %v542 = vunpack.c.l.b16 %v407
    %v543 = vunpack.c.l.b16 %v408
    %v544 = vunpack.c.l.b16 %v409
    %v545 = vunpack.c.l.b16 %v410
    %v546 = vunpack.c.l.b16 %v411
    %v547 = vunpack.c.l.b16 %v412
    %v548 = vunpack.c.l.b16 %v413
    %v549 = vunpack.c.l.b16 %v414
    %v550 = vunpack.c.l.b16 %v415
    %v551 = vunpack.c.l.b16 %v416
    %v552 = vunpack.c.l.b16 %v417
    %v553 = vunpack.c.l.b16 %v418
    %v554 = vunpack.c.l.b16 %v419
    %v555 = vunpack.c.l.b16 %v420
    %v556 = vunpack.c.l.b16 %v421
    %v557 = vunpack.c.l.b16 %v422
    %v558 = vunpack.c.l.b16 %v423
    %v559 = vunpack.c.l.b16 %v424
    %v560 = vunpack.c.l.b16 %v425
    %v561 = vunpack.c.l.b16 %v426
    %v562 = vunpack.c.l.b16 %v427
    %v563 = vunpack.c.l.b16 %v428
    %v564 = vunpack.c.l.b16 %v429
    %v565 = vunpack.c.l.b16 %v430
    %v566 = vunpack.c.l.b16 %v431
    %v567 = vunpack.c.l.b16 %v432
    %v568 = vunpack.c.l.b16 %v433
    %v569 = vunpack.c.l.b16 %v434
    %v570 = vunpack.c.l.b16 %v435
    %v571 = vunpack.c.l.b16 %v436
    %v572 = vunpack.c.l.b16 %v437
    %v573 = vunpack.c.l.b16 %v438
    %v574 = vunpack.c.l.b16 %v439
    %v575 = vunpack.c.l.b16 %v440
    %v576 = vunpack.c.l.b16 %v441
    %v577 = vunpack.c.l.b16 %v442
    %v578 = vunpack.c.l.b16 %v443
    %v579 = vunpack.c.l.b16 %v444
    %v580 = vunpack.c.l.b16 %v445
    %v581 = vunpack.c.l.b16 %v446
    %v582 = vunpack.c.l.b16 %v447
    %v583 = vunpack.c.l.b16 %v448
    %v584 = vunpack.c.l.b16 %v449
    %v585 = vunpack.c.l.b16 %v450
    %v586 = vunpack.c.l.b16 %v451
    %v587 = vunpack.c.l.b16 %v452
    %v588 = vunpack.c.l.b16 %v453
    %v589 = vunpack.c.l.b16 %v454
    %v590 = vunpack.c.l.b16 %v455
    %v591 = vunpack.c.l.b16 %v456
    %v592 = vunpack.c.l.b16 %v457
    %v593 = vunpack.c.l.b16 %v458
    %v594 = vunpack.c.l.b16 %v459
    %v595 = vunpack.c.l.b16 %v460
    %v596 = vunpack.c.l.b16 %v461
    %v597 = vunpack.c.l.b16 %v462
    %v598 = vunpack.c.l.b16 %v463
    %v599 = vunpack.c.l.b16 %v464
    %v600 = vunpack.c.l.b16 %v465
    %v601 = vunpack.c.l.b16 %v466
    %v602 = vunpack.c.l.b16 %v467
    %v603 = vunpack.c.l.b16 %v468
    %v604 = vunpack.c.l.b16 %v469
    %v605 = vpack.c.b16 %v542, %v541
    %v606 = vpack.c.b16 %v544, %v543
    %v607 = vpack.c.b16 %v546, %v545
    %v608 = vpack.c.b16 %v548, %v547
    %v609 = vpack.c.b16 %v550, %v549
    %v610 = vpack.c.b16 %v552, %v551
    %v611 = vpack.c.b16 %v554, %v553
    %v612 = vpack.c.b16 %v556, %v555
    %v613 = vpack.c.b16 %v558, %v557
    %v614 = vpack.c.b16 %v560, %v559
    %v615 = vpack.c.b16 %v562, %v561
    %v616 = vpack.c.b16 %v564, %v563
    %v617 = vpack.c.b16 %v566, %v565
    %v618 = vpack.c.b16 %v568, %v567
    %v619 = vpack.c.b16 %v570, %v569
    %v620 = vpack.c.b16 %v572, %v571
    %v621 = vpack.c.b16 %v574, %v573
    %v622 = vpack.c.b16 %v576, %v575
    %v623 = vpack.c.b16 %v578, %v577
    %v624 = vpack.c.b16 %v580, %v579
    %v625 = vpack.c.b16 %v582, %v581
    %v626 = vpack.c.b16 %v584, %v583
    %v627 = vpack.c.b16 %v586, %v585
    %v628 = vpack.c.b16 %v588, %v587
    %v629 = vpack.c.b16 %v590, %v589
    %v630 = vpack.c.b16 %v592, %v591
    %v631 = vpack.c.b16 %v594, %v593
    %v632 = vpack.c.b16 %v596, %v595
    %v633 = vpack.c.b16 %v598, %v597
    %v634 = vpack.c.b16 %v600, %v599
    %v635 = vpack.c.b16 %v602, %v601
    %v636 = vpack.c.b16 %v604, %v603
    %669 = vmatprep.subr.bf16.mxu0 0
    %670 = vmatpush1.bf16.msra.mxu0 %v605
    %671 = vmatprep.subr.bf16.mxu0 0
    %672 = vmatpush1.bf16.msra.mxu0 %v606
    %673 = vmatprep.subr.bf16.mxu0 0
    %674 = vmatpush1.bf16.msra.mxu0 %v607
    %675 = vmatprep.subr.bf16.mxu0 0
    %676 = vmatpush1.bf16.msra.mxu0 %v608
    %677 = vmatprep.subr.bf16.mxu0 0
    %678 = vmatpush1.bf16.msra.mxu0 %v609
    %679 = vmatprep.subr.bf16.mxu0 0
    %680 = vmatpush1.bf16.msra.mxu0 %v610
    %681 = vmatprep.subr.bf16.mxu0 0
    %682 = vmatpush1.bf16.msra.mxu0 %v611
    %683 = vmatprep.subr.bf16.mxu0 0
    %684 = vmatpush1.bf16.msra.mxu0 %v612
    %685 = vmatprep.subr.bf16.mxu0 0
    %686 = vmatpush1.bf16.msra.mxu0 %v613
    %687 = vmatprep.subr.bf16.mxu0 0
    %688 = vmatpush1.bf16.msra.mxu0 %v614
    %689 = vmatprep.subr.bf16.mxu0 0
    %690 = vmatpush1.bf16.msra.mxu0 %v615
    %691 = vmatprep.subr.bf16.mxu0 0
    %692 = vmatpush1.bf16.msra.mxu0 %v616
    %693 = vmatprep.subr.bf16.mxu0 0
    %694 = vmatpush1.bf16.msra.mxu0 %v617
    %695 = vmatprep.subr.bf16.mxu0 0
    %696 = vmatpush1.bf16.msra.mxu0 %v618
    %697 = vmatprep.subr.bf16.mxu0 0
    %698 = vmatpush1.bf16.msra.mxu0 %v619
    %699 = vmatprep.subr.bf16.mxu0 0
    %700 = vmatpush1.bf16.msra.mxu0 %v620
    %701 = vmatprep.mubr.bf16.mxu0 %v403
    %702 = vmatmul.mubr.bf16.gmra.mrb[0].mxu0 %v402
    %v703 = vpop.f32.mrb[0].mxu0
    %v704 = vadd.f32 %v475, %v703
    %v705 = vpop.f32.mrb[0].mxu0
    %v706 = vpop.f32.mrb[0].mxu0
    %v707 = vadd.f32 %v475, %v706
    %v708 = vpop.f32.mrb[0].mxu0
    %709 = vdwg.mxu0
    %710 = vmatprep.subr.bf16.mxu0 0
    %711 = vmatpush1.bf16.msra.mxu0 %v621
    %712 = vmatprep.subr.bf16.mxu0 0
    %713 = vmatpush1.bf16.msra.mxu0 %v622
    %714 = vmatprep.subr.bf16.mxu0 0
    %715 = vmatpush1.bf16.msra.mxu0 %v623
    %716 = vmatprep.subr.bf16.mxu0 0
    %717 = vmatpush1.bf16.msra.mxu0 %v624
    %718 = vmatprep.subr.bf16.mxu0 0
    %719 = vmatpush1.bf16.msra.mxu0 %v625
    %720 = vmatprep.subr.bf16.mxu0 0
    %721 = vmatpush1.bf16.msra.mxu0 %v626
    %722 = vmatprep.subr.bf16.mxu0 0
    %723 = vmatpush1.bf16.msra.mxu0 %v627
    %724 = vmatprep.subr.bf16.mxu0 0
    %725 = vmatpush1.bf16.msra.mxu0 %v628
    %726 = vmatprep.subr.bf16.mxu0 0
    %727 = vmatpush1.bf16.msra.mxu0 %v629
    %728 = vmatprep.subr.bf16.mxu0 0
    %729 = vmatpush1.bf16.msra.mxu0 %v630
    %730 = vmatprep.subr.bf16.mxu0 0
    %731 = vmatpush1.bf16.msra.mxu0 %v631
    %732 = vmatprep.subr.bf16.mxu0 0
    %733 = vmatpush1.bf16.msra.mxu0 %v632
    %734 = vmatprep.subr.bf16.mxu0 0
    %735 = vmatpush1.bf16.msra.mxu0 %v633
    %736 = vmatprep.subr.bf16.mxu0 0
    %737 = vmatpush1.bf16.msra.mxu0 %v634
    %738 = vmatprep.subr.bf16.mxu0 0
    %739 = vmatpush1.bf16.msra.mxu0 %v635
    %740 = vmatprep.subr.bf16.mxu0 0
    %741 = vmatpush1.bf16.msra.mxu0 %v636
    %742 = vmatprep.mubr.bf16.mxu0 %v405
    %743 = vmatmul.mubr.bf16.gmra.mrb[0].mxu0 %v404
    %v744 = vpop.f32.mrb[0].mxu0
    %v745 = vadd.f32 %v704, %v744
    %v746 = vpop.f32.mrb[0].mxu0
    %v747 = vpop.f32.mrb[0].mxu0
    %v748 = vadd.f32 %v707, %v747
    %v749 = vpop.f32.mrb[0].mxu0
    %750 = vdwg.mxu0
    %751 = vst [vmem:[#allocation11] sm:$0xff] %v745
    %752 = vst [vmem:[#allocation11 + $0x8] sm:$0xff] %v748
    // Predicated region
    $region42: #{ground_truth_estimator.1} parent=1 // pred_check
      _
    $region43: #{ground_truth_estimator.1} parent=1 // pred_check_branch
      %754 = sbr.rel (0) target = $region45
    $region44: #{ground_truth_estimator.1} parent=1 // pred_region
      %s756 = ssub.s32 256, 256
      %757 = vsyncadd [#allocation4], %s756
      %s758 = sshll.u32 [#allocation11], 4
      %s759 = int_to_ptr.vmem [resolvable:$true] %s758
      %764 = dma.vmem_to_hbm [thread:$0]  %s759, 256, %s5, [#allocation4], 128, 128, 8
    $region45: #{ground_truth_estimator.1} parent=1 // pred_fallthru
      _
    // Predicated region
    $region46: #{ground_truth_estimator.1} parent=1 // pred_check
      _
    $region47: #{ground_truth_estimator.1} parent=1 // pred_check_branch
      %766 = sbr.rel (0) target = $region49
    $region48: #{ground_truth_estimator.1} parent=1 // pred_region
      %767 = dma.done [#allocation4], 256
    $region49: #{ground_truth_estimator.1} parent=1 // pred_fallthru
      _
    %768 = vsyncpa [#allocation3], 1
    %769 = vsyncpa [#allocation6], 1
    %770 = vsyncpa [#allocation9], 1
    %771 = vsyncpa [#allocation4], 1

</llo_original>
